<compile_context>
chip_gen: v6e
topology: v6e:2x2x1
jax: 0.10.0
libtpu: 0.0.40
codegen_flags: <defaults>
</compile_context>

<pallas_src>
import jax
import jax.numpy as jnp
from jax.experimental import pallas as pl
from jax.experimental.pallas import tpu as pltpu


NC_LANES = 128  # pad the FC output width to a lane-dense multiple of 128


# ----------------------------------------------------------------------------
# Fused kernel: im2col matmul (stem conv) + bias + ReLU + mean-pool + FC
# ----------------------------------------------------------------------------
def fused_stem_pool_fc_kernel(p_ref, wc_ref, bc_ref, wf_ref, bf_ref,
                              feat_ref, pool_ref, out_ref):
    # p_ref    : (1, H*W, 9*Cin)  im2col patches for one batch element
    # wc_ref   : (9*Cin, C)       stem conv weights in im2col layout
    # bc_ref   : (1, C)
    # wf_ref   : (C, NCp)         FC weights, N padded to 128 lanes
    # bf_ref   : (1, NCp)
    # feat_ref : (1, C, H*W)      lane-dense NCHW-ish feature output
    # pool_ref : (1, 1, C)
    # out_ref  : (1, 1, NCp)
    patches = p_ref[0]                                           # (HW, K)

    # single K = 9*Cin contraction on the MXU (vs nine K=4 dots before)
    acc = jnp.dot(patches, wc_ref[...],
                  preferred_element_type=jnp.float32)            # (HW, C)
    feat = jnp.maximum(acc + bc_ref[...], 0.0)                   # (HW, C)

    # features in (C, H*W): one XLU transpose, last dim is a multiple of 128
    feat_ref[0] = jnp.transpose(feat)

    # AdaptiveAvgPool2d(1) == mean over the H*W (sublane) axis
    pooled = jnp.mean(feat, axis=0, keepdims=True)               # (1, C)
    pool_ref[0] = pooled

    # fc: (1, C) @ (C, NCp) + bias, lane-dense output
    out_ref[0] = (jnp.dot(pooled, wf_ref[...],
                          preferred_element_type=jnp.float32) + bf_ref[...])


# ----------------------------------------------------------------------------
# Full forward (mirrors CustomEfficientNet.forward with attention=None)
# ----------------------------------------------------------------------------
@jax.jit
def custom_efficientnet_forward(x_nchw, params):
    B, Cin, H, W = x_nchw.shape
    C = params["stem_w"].shape[-1]
    NC = params["fc_w"].shape[-1]
    NCp = ((NC + NC_LANES - 1) // NC_LANES) * NC_LANES
    HW = H * W
    K = 9 * Cin

    # im2col in the wrapper (the 1-px "same" pad is folded into the patch
    # construction; XLA fuses this into a single producer for the kernel).
    # Column ordering is (kh, kw, cin), matching stem_w.reshape(9*Cin, C).
    x_nhwc = jnp.transpose(x_nchw, (0, 2, 3, 1))
    x_pad = jnp.pad(x_nhwc, ((0, 0), (1, 1), (1, 1), (0, 0)))
    patches = jnp.concatenate(
        [x_pad[:, kh:kh + H, kw:kw + W, :]
         for kh in range(3) for kw in range(3)], axis=-1)
    patches = patches.reshape(B, HW, K)

    wc = params["stem_w"].reshape(K, C)
    bc = params["stem_b"]
    # NOTE: could cast wc/patches/wf to bf16 for native MXU rate on v6e/v7x
    # (accumulate in f32); kept f32 here to preserve a tight numeric check.
    wf = jnp.pad(params["fc_w"], ((0, 0), (0, NCp - NC)))
    bf = jnp.pad(params["fc_b"], ((0, 0), (0, NCp - NC)))

    feat_chw, pooled3, out3 = pl.pallas_call(
        fused_stem_pool_fc_kernel,
        out_shape=(
            jax.ShapeDtypeStruct((B, C, HW), jnp.float32),
            jax.ShapeDtypeStruct((B, 1, C), jnp.float32),
            jax.ShapeDtypeStruct((B, 1, NCp), jnp.float32),
        ),
        grid_spec=pltpu.PrefetchScalarGridSpec(
            num_scalar_prefetch=0,
            grid=(B,),  # one image per step; parallel -> both TCs on v7x
            in_specs=[
                pl.BlockSpec((1, HW, K), lambda i: (i, 0, 0)),
                pl.BlockSpec((K, C), lambda i: (0, 0)),
                pl.BlockSpec((1, C), lambda i: (0, 0)),
                pl.BlockSpec((C, NCp), lambda i: (0, 0)),
                pl.BlockSpec((1, NCp), lambda i: (0, 0)),
            ],
            out_specs=(
                pl.BlockSpec((1, C, HW), lambda i: (i, 0, 0)),
                pl.BlockSpec((1, 1, C), lambda i: (i, 0, 0)),
                pl.BlockSpec((1, 1, NCp), lambda i: (i, 0, 0)),
            ),
        ),
        compiler_params=pltpu.CompilerParams(
            dimension_semantics=("parallel",)),
    )(patches, wc, bc, wf, bf)

    # free reshape: (B, C, H*W) -> NCHW features (no wrapper transpose)
    features = feat_chw.reshape(B, C, H, W)
    pooled = pooled3[:, 0, :]
    output = out3[:, 0, :NC]
    return features, pooled, output


def init_params(key, in_channels, n_features, num_classes):
    k1, k2, k3, k4 = jax.random.split(key, 4)
    return {
        "stem_w": jax.random.normal(k1, (3, 3, in_channels, n_features),
                                    jnp.float32) * 0.05,
        "stem_b": jax.random.normal(k2, (1, n_features), jnp.float32) * 0.01,
        "fc_w": jax.random.normal(k3, (n_features, num_classes),
                                  jnp.float32) * 0.05,
        "fc_b": jax.random.normal(k4, (1, num_classes), jnp.float32) * 0.01,
    }


if __name__ == "__main__":
    key = jax.random.PRNGKey(0)
    kx, kp = jax.random.split(key)

    B, Cin, H, W = 2, 4, 16, 16
    n_features = 128
    num_classes = 11

    x = jax.random.normal(kx, (B, Cin, H, W), jnp.float32)
    params = init_params(kp, Cin, n_features, num_classes)

    features, pooled, output = custom_efficientnet_forward(x, params)
    jax.block_until_ready((features, pooled, output))

    assert features.shape == (B, n_features, H, W)
    assert pooled.shape == (B, n_features)
    assert output.shape == (B, num_classes)

    # numerical check against a pure-JAX reference
    x_nhwc = jnp.transpose(x, (0, 2, 3, 1))
    ref_feat = jax.lax.conv_general_dilated(
        x_nhwc, params["stem_w"], (1, 1), "SAME",
        dimension_numbers=("NHWC", "HWIO", "NHWC")) + params["stem_b"]
    ref_feat = jnp.maximum(ref_feat, 0.0)
    ref_pooled = jnp.mean(ref_feat, axis=(1, 2))
    ref_out = ref_pooled @ params["fc_w"] + params["fc_b"]

    assert jnp.allclose(jnp.transpose(ref_feat, (0, 3, 1, 2)), features,
                        atol=1e-3)
    assert jnp.allclose(ref_pooled, pooled, atol=1e-3)
    assert jnp.allclose(ref_out, output, atol=1e-3)

    print("KERNEL_OK")
</pallas_src>

<mosaic_0001>
module attributes {stable_mosaic.version = 11 : i64} {
  func.func @fused_stem_pool_fc_kernel(%arg0: i32, %arg1: memref<1x256x36xf32, #tpu.memory_space<vmem>>, %arg2: memref<36x128xf32, #tpu.memory_space<vmem>>, %arg3: memref<1x128xf32, #tpu.memory_space<vmem>>, %arg4: memref<128x128xf32, #tpu.memory_space<vmem>>, %arg5: memref<1x128xf32, #tpu.memory_space<vmem>>, %arg6: memref<1x128x256xf32, #tpu.memory_space<vmem>>, %arg7: memref<1x1x128xf32, #tpu.memory_space<vmem>>, %arg8: memref<1x1x128xf32, #tpu.memory_space<vmem>>) attributes {dimension_semantics = [#tpu.dimension_semantics<parallel>], iteration_bounds = array<i64: 2>, scalar_prefetch = 0 : i64, scratch_operands = 0 : i64, tpu.core_type = #tpu.core_type<tc>, window_params = [{transform_indices = @transform_0, window_bounds = array<i64: 1, 256, 36>}, {pipeline_mode = #tpu.pipeline_mode<synchronous>, transform_indices = @transform_1, window_bounds = array<i64: 36, 128>}, {pipeline_mode = #tpu.pipeline_mode<synchronous>, transform_indices = @transform_2, window_bounds = array<i64: 1, 128>}, {pipeline_mode = #tpu.pipeline_mode<synchronous>, transform_indices = @transform_3, window_bounds = array<i64: 128, 128>}, {pipeline_mode = #tpu.pipeline_mode<synchronous>, transform_indices = @transform_4, window_bounds = array<i64: 1, 128>}, {transform_indices = @transform_5, window_bounds = array<i64: 1, 128, 256>}, {transform_indices = @transform_6, window_bounds = array<i64: 1, 1, 128>}, {transform_indices = @transform_7, window_bounds = array<i64: 1, 1, 128>}]} {
    %c0 = arith.constant 0 : index
    %c0_0 = arith.constant 0 : index
    %c0_1 = arith.constant 0 : index
    %0 = vector.load %arg1[%c0, %c0_0, %c0_1] : memref<1x256x36xf32, #tpu.memory_space<vmem>>, vector<1x256x36xf32>
    %1 = vector.shape_cast %0 : vector<1x256x36xf32> to vector<256x36xf32>
    %c0_2 = arith.constant 0 : index
    %c0_3 = arith.constant 0 : index
    %2 = vector.load %arg2[%c0_2, %c0_3] : memref<36x128xf32, #tpu.memory_space<vmem>>, vector<36x128xf32>
    %cst = arith.constant dense<0.000000e+00> : vector<256x128xf32>
    %3 = tpu.matmul %1, %2, %cst {dimension_numbers = #tpu.dot_dimension_numbers<[1], [0], [0], [1], [0, 0, 1, 1], [], []>} : vector<256x36xf32>, vector<36x128xf32>, vector<256x128xf32> -> vector<256x128xf32>
    %c0_4 = arith.constant 0 : index
    %c0_5 = arith.constant 0 : index
    %4 = vector.load %arg3[%c0_4, %c0_5] : memref<1x128xf32, #tpu.memory_space<vmem>>, vector<1x128xf32>
    %5 = vector.broadcast %4 : vector<1x128xf32> to vector<256x128xf32>
    %6 = arith.addf %3, %5 : vector<256x128xf32>
    %cst_6 = arith.constant 0.000000e+00 : f32
    %7 = vector.broadcast %cst_6 : f32 to vector<256x128xf32>
    %8 = arith.maximumf %6, %7 : vector<256x128xf32>
    %9 = tpu.transpose %8, [1, 0] : vector<256x128xf32> -> vector<128x256xf32>
    %c0_7 = arith.constant 0 : index
    %c0_8 = arith.constant 0 : index
    %c0_9 = arith.constant 0 : index
    %10 = vector.load %arg6[%c0_7, %c0_8, %c0_9] : memref<1x128x256xf32, #tpu.memory_space<vmem>>, vector<1x128x256xf32>
    %11 = vector.shape_cast %10 : vector<1x128x256xf32> to vector<128x256xf32>
    %12 = vector.shape_cast %9 : vector<128x256xf32> to vector<1x128x256xf32>
    tpu.vector_store %arg6[%c0_7, %c0_8, %c0_9], %12 {strides = array<i32>} : memref<1x128x256xf32, #tpu.memory_space<vmem>>, vector<1x128x256xf32>,
    %cst_10 = arith.constant dense<0.000000e+00> : vector<128xf32>
    %13 = vector.multi_reduction <add>, %8, %cst_10 [0] : vector<256x128xf32> to vector<128xf32>
    %14 = vector.shape_cast %13 : vector<128xf32> to vector<1x128xf32>
    %cst_11 = arith.constant 2.560000e+02 : f32
    %15 = vector.broadcast %cst_11 : f32 to vector<1x128xf32>
    %16 = arith.divf %14, %15 : vector<1x128xf32>
    %c0_12 = arith.constant 0 : index
    %c0_13 = arith.constant 0 : index
    %c0_14 = arith.constant 0 : index
    %17 = vector.load %arg7[%c0_12, %c0_13, %c0_14] : memref<1x1x128xf32, #tpu.memory_space<vmem>>, vector<1x1x128xf32>
    %18 = vector.shape_cast %17 : vector<1x1x128xf32> to vector<1x128xf32>
    %19 = vector.shape_cast %16 : vector<1x128xf32> to vector<1x1x128xf32>
    tpu.vector_store %arg7[%c0_12, %c0_13, %c0_14], %19 {strides = array<i32>} : memref<1x1x128xf32, #tpu.memory_space<vmem>>, vector<1x1x128xf32>,
    %c0_15 = arith.constant 0 : index
    %c0_16 = arith.constant 0 : index
    %20 = vector.load %arg4[%c0_15, %c0_16] : memref<128x128xf32, #tpu.memory_space<vmem>>, vector<128x128xf32>
    %cst_17 = arith.constant dense<0.000000e+00> : vector<1x128xf32>
    %21 = tpu.matmul %16, %20, %cst_17 {dimension_numbers = #tpu.dot_dimension_numbers<[1], [0], [0], [1], [0, 0, 1, 1], [], []>} : vector<1x128xf32>, vector<128x128xf32>, vector<1x128xf32> -> vector<1x128xf32>
    %c0_18 = arith.constant 0 : index
    %c0_19 = arith.constant 0 : index
    %22 = vector.load %arg5[%c0_18, %c0_19] : memref<1x128xf32, #tpu.memory_space<vmem>>, vector<1x128xf32>
    %23 = arith.addf %21, %22 : vector<1x128xf32>
    %c0_20 = arith.constant 0 : index
    %c0_21 = arith.constant 0 : index
    %c0_22 = arith.constant 0 : index
    %24 = vector.load %arg8[%c0_20, %c0_21, %c0_22] : memref<1x1x128xf32, #tpu.memory_space<vmem>>, vector<1x1x128xf32>
    %25 = vector.shape_cast %24 : vector<1x1x128xf32> to vector<1x128xf32>
    %26 = vector.shape_cast %23 : vector<1x128xf32> to vector<1x1x128xf32>
    tpu.vector_store %arg8[%c0_20, %c0_21, %c0_22], %26 {strides = array<i32>} : memref<1x1x128xf32, #tpu.memory_space<vmem>>, vector<1x1x128xf32>,
    return
  }
  func.func @transform_0(%arg0: i32) -> (i32, i32, i32) {
    %c0_i32 = arith.constant 0 : i32
    %c0_i32_0 = arith.constant 0 : i32
    %c0_i32_1 = arith.constant 0 : i32
    return %arg0, %c0_i32, %c0_i32_0 : i32, i32, i32
  }
  func.func @transform_1(%arg0: i32) -> (i32, i32) {
    %c0_i32 = arith.constant 0 : i32
    %c0_i32_0 = arith.constant 0 : i32
    %c0_i32_1 = arith.constant 0 : i32
    return %c0_i32, %c0_i32_0 : i32, i32
  }
  func.func @transform_2(%arg0: i32) -> (i32, i32) {
    %c0_i32 = arith.constant 0 : i32
    %c0_i32_0 = arith.constant 0 : i32
    %c0_i32_1 = arith.constant 0 : i32
    return %c0_i32, %c0_i32_0 : i32, i32
  }
  func.func @transform_3(%arg0: i32) -> (i32, i32) {
    %c0_i32 = arith.constant 0 : i32
    %c0_i32_0 = arith.constant 0 : i32
    %c0_i32_1 = arith.constant 0 : i32
    return %c0_i32, %c0_i32_0 : i32, i32
  }
  func.func @transform_4(%arg0: i32) -> (i32, i32) {
    %c0_i32 = arith.constant 0 : i32
    %c0_i32_0 = arith.constant 0 : i32
    %c0_i32_1 = arith.constant 0 : i32
    return %c0_i32, %c0_i32_0 : i32, i32
  }
  func.func @transform_5(%arg0: i32) -> (i32, i32, i32) {
    %c0_i32 = arith.constant 0 : i32
    %c0_i32_0 = arith.constant 0 : i32
    %c0_i32_1 = arith.constant 0 : i32
    return %arg0, %c0_i32, %c0_i32_0 : i32, i32, i32
  }
  func.func @transform_6(%arg0: i32) -> (i32, i32, i32) {
    %c0_i32 = arith.constant 0 : i32
    %c0_i32_0 = arith.constant 0 : i32
    %c0_i32_1 = arith.constant 0 : i32
    return %arg0, %c0_i32, %c0_i32_0 : i32, i32, i32
  }
  func.func @transform_7(%arg0: i32) -> (i32, i32, i32) {
    %c0_i32 = arith.constant 0 : i32
    %c0_i32_0 = arith.constant 0 : i32
    %c0_i32_1 = arith.constant 0 : i32
    return %arg0, %c0_i32, %c0_i32_0 : i32, i32, i32
  }
}

</mosaic_0001>

<llo_original>
// kernel: custom_efficientnet_forward.1
$region0: #{custom_efficientnet_forward.1}
  #allocation0 [shape = 'u32[]', space=smem, size = 0x4, offset = 0x4, fixed_abs, tag = 'smem constant byte address 0x4 - core index']
  #allocation1 [shape = 'u32[144,128]{1,0:T(1,128)}', space=vmem, size = 0x12000, scoped, tag = 'internal scratch']
  %s0 = inlined_call_operand.vmem [shape: f32[2,256,36], index: 0, kind: input, shape index: {}]
  %s1 = inlined_call_operand.vmem [shape: f32[36,128], index: 1, kind: input, shape index: {}]
  %s2 = inlined_call_operand.vmem [shape: f32[1,128], index: 2, kind: input, shape index: {}]
  %s3 = inlined_call_operand.vmem [shape: f32[128,128], index: 3, kind: input, shape index: {}]
  %s4 = inlined_call_operand.vmem [shape: f32[1,128], index: 4, kind: input, shape index: {}]
  %s5 = inlined_call_operand.vmem [shape: f32[2,128,256], index: 5, kind: output, shape index: {0}]
  %s6 = inlined_call_operand.hbm [shape: f32[2,1,128], index: 6, kind: output, shape index: {1}]
  %s7 = inlined_call_operand.hbm [shape: f32[2,1,128], index: 7, kind: output, shape index: {2}]
  %8 = xla_tuple %s5, %s6, %s7
  %s9 = sld [smem:[#allocation0]]
  $region69: #{custom_efficientnet_forward.1} parent=0
    _
  %s11 = ssub.s32 1, %s9
  %s12 = scalar_select 0, %s11, %s9
  $region1: #{custom_efficientnet_forward.1} parent=0
    #allocation2 [shape = 'u8[1024]{0}', space=vmem, size = 0x400, scoped, tag = 'output window, operand 1']
    #allocation3 [shape = 's32[2]{0}', space=sflag, size = 0x8, scoped, tag = 'scoped memory for custom_efficientnet_forward.1']
    #allocation4 [shape = 'u8[1024]{0}', space=vmem, size = 0x400, scoped, tag = 'output window, operand 2']
    #allocation5 [shape = 's32[2]{0}', space=sflag, size = 0x8, scoped, tag = 'scoped memory for custom_efficientnet_forward.1']
    %13 = vsyncpa [#allocation3], 0
    %s14 = scalar_lea.sflag [#allocation3], 1
    %15 = vsyncpa %s14, 0
    %16 = vsyncpa [#allocation5], 0
    %s17 = scalar_lea.sflag [#allocation5], 1
    %18 = vsyncpa %s17, 0
    loop: start=0, step=1, limit=4
    $region2: #{custom_efficientnet_forward.1} parent=1 // loop_pre_header
      _
    $region3: #{custom_efficientnet_forward.1} parent=1 // loop_header
      %s20 = sphi 0, %s24
      %p21 = scmp.ge.s32.totalorder %s20, 4
      %s30 = sphi 0, %s32
      %s33 = sphi 0, %s30
      %s34 = sphi 0, %s33
      %s50 = sphi 0, %s34
      %s54 = sphi 0, %s54
      %s56 = sphi 0, %s54
      %s57 = sphi 0, %s56
      %s71 = sphi 0, %s57
      %s75 = sphi 0, %s75
      %s77 = sphi 0, %s75
      %s78 = sphi 0, %s77
      %s92 = sphi 0, %s78
      %s96 = sphi 0, %s96
      %s98 = sphi 0, %s96
      %s99 = sphi 0, %s98
      %s113 = sphi 0, %s99
      %s117 = sphi 0, %s117
      %s119 = sphi 0, %s117
      %s120 = sphi 0, %s119
      %s134 = sphi 0, %s120
      %s140 = sphi 0, %s142
      %s143 = sphi 0, %s140
      %s144 = sphi 0, %s143
      %s160 = sphi 0, %s144
      %s166 = sphi 0, %s168
      %s169 = sphi 0, %s166
      %s170 = sphi 0, %s169
      %s186 = sphi 0, %s170
      %s192 = sphi 0, %s194
      %s195 = sphi 0, %s192
      %s196 = sphi 0, %s195
      %s212 = sphi 0, %s196
    $region4: #{custom_efficientnet_forward.1} parent=1 // loop_header_branch
      %23 = sbr.rel (%p21) target = $region8
    $region5: #{custom_efficientnet_forward.1} parent=1 // loop_body
      %s25 = ssub.s32 %s20, 1
      %s26 = ssub.s32 %s20, 2
      %s27 = sadd.s32 %s20, 1
      %s28 = ssub.s32 %s20, %s27
      %p29 = scmp.eq.s32.totalorder %s28, 0
      %s31 = sadd.s32 %s30, 1
      %s32 = scalar_select %p29, %s30, %s31
      %p35 = pneg %p29
      %p36 = scmp.eq.s32.totalorder %s20, 1
      %p37 = por %p35, %p36
      %p38 = scmp.ne.s32.totalorder %s30, %s33
      %p39 = scmp.eq.s32.totalorder %s20, 0
      %p40 = por %p38, %p39
      %p41 = scmp.ne.s32.totalorder %s30, %s33
      %p42 = scmp.eq.s32.totalorder %s25, 1
      %p43 = por %p41, %p42
      %p44 = scmp.ne.s32.totalorder %s33, %s34
      %p45 = scmp.eq.s32.totalorder %s25, 0
      %p46 = por %p44, %p45
      %p47 = scmp.ne.s32.totalorder %s33, %s34
      %p48 = scmp.eq.s32.totalorder %s26, 1
      %p49 = por %p47, %p48
      %p51 = scmp.ne.s32.totalorder %s34, %s50
      %p52 = scmp.eq.s32.totalorder %s26, 0
      %p53 = por %p51, %p52
      %s55 = sadd.s32 %s54, 1
      %p58 = scmp.eq.s32.totalorder %s20, 1
      %p59 = scmp.ne.s32.totalorder %s54, %s56
      %p60 = scmp.eq.s32.totalorder %s20, 0
      %p61 = por %p59, %p60
      %p62 = scmp.ne.s32.totalorder %s54, %s56
      %p63 = scmp.eq.s32.totalorder %s25, 1
      %p64 = por %p62, %p63
      %p65 = scmp.ne.s32.totalorder %s56, %s57
      %p66 = scmp.eq.s32.totalorder %s25, 0
      %p67 = por %p65, %p66
      %p68 = scmp.ne.s32.totalorder %s56, %s57
      %p69 = scmp.eq.s32.totalorder %s26, 1
      %p70 = por %p68, %p69
      %p72 = scmp.ne.s32.totalorder %s57, %s71
      %p73 = scmp.eq.s32.totalorder %s26, 0
      %p74 = por %p72, %p73
      %s76 = sadd.s32 %s75, 1
      %p79 = scmp.eq.s32.totalorder %s20, 1
      %p80 = scmp.ne.s32.totalorder %s75, %s77
      %p81 = scmp.eq.s32.totalorder %s20, 0
      %p82 = por %p80, %p81
      %p83 = scmp.ne.s32.totalorder %s75, %s77
      %p84 = scmp.eq.s32.totalorder %s25, 1
      %p85 = por %p83, %p84
      %p86 = scmp.ne.s32.totalorder %s77, %s78
      %p87 = scmp.eq.s32.totalorder %s25, 0
      %p88 = por %p86, %p87
      %p89 = scmp.ne.s32.totalorder %s77, %s78
      %p90 = scmp.eq.s32.totalorder %s26, 1
      %p91 = por %p89, %p90
      %p93 = scmp.ne.s32.totalorder %s78, %s92
      %p94 = scmp.eq.s32.totalorder %s26, 0
      %p95 = por %p93, %p94
      %s97 = sadd.s32 %s96, 1
      %p100 = scmp.eq.s32.totalorder %s20, 1
      %p101 = scmp.ne.s32.totalorder %s96, %s98
      %p102 = scmp.eq.s32.totalorder %s20, 0
      %p103 = por %p101, %p102
      %p104 = scmp.ne.s32.totalorder %s96, %s98
      %p105 = scmp.eq.s32.totalorder %s25, 1
      %p106 = por %p104, %p105
      %p107 = scmp.ne.s32.totalorder %s98, %s99
      %p108 = scmp.eq.s32.totalorder %s25, 0
      %p109 = por %p107, %p108
      %p110 = scmp.ne.s32.totalorder %s98, %s99
      %p111 = scmp.eq.s32.totalorder %s26, 1
      %p112 = por %p110, %p111
      %p114 = scmp.ne.s32.totalorder %s99, %s113
      %p115 = scmp.eq.s32.totalorder %s26, 0
      %p116 = por %p114, %p115
      %s118 = sadd.s32 %s117, 1
      %p121 = scmp.eq.s32.totalorder %s20, 1
      %p122 = scmp.ne.s32.totalorder %s117, %s119
      %p123 = scmp.eq.s32.totalorder %s20, 0
      %p124 = por %p122, %p123
      %p125 = scmp.ne.s32.totalorder %s117, %s119
      %p126 = scmp.eq.s32.totalorder %s25, 1
      %p127 = por %p125, %p126
      %p128 = scmp.ne.s32.totalorder %s119, %s120
      %p129 = scmp.eq.s32.totalorder %s25, 0
      %p130 = por %p128, %p129
      %p131 = scmp.ne.s32.totalorder %s119, %s120
      %p132 = scmp.eq.s32.totalorder %s26, 1
      %p133 = por %p131, %p132
      %p135 = scmp.ne.s32.totalorder %s120, %s134
      %p136 = scmp.eq.s32.totalorder %s26, 0
      %p137 = por %p135, %p136
      %s138 = ssub.s32 %s20, %s27
      %p139 = scmp.eq.s32.totalorder %s138, 0
      %s141 = sadd.s32 %s140, 1
      %s142 = scalar_select %p139, %s140, %s141
      %p145 = pneg %p139
      %p146 = scmp.eq.s32.totalorder %s20, 1
      %p147 = por %p145, %p146
      %p148 = scmp.ne.s32.totalorder %s140, %s143
      %p149 = scmp.eq.s32.totalorder %s20, 0
      %p150 = por %p148, %p149
      %p151 = scmp.ne.s32.totalorder %s140, %s143
      %p152 = scmp.eq.s32.totalorder %s25, 1
      %p153 = por %p151, %p152
      %p154 = scmp.ne.s32.totalorder %s143, %s144
      %p155 = scmp.eq.s32.totalorder %s25, 0
      %p156 = por %p154, %p155
      %p157 = scmp.ne.s32.totalorder %s143, %s144
      %p158 = scmp.eq.s32.totalorder %s26, 1
      %p159 = por %p157, %p158
      %p161 = scmp.ne.s32.totalorder %s144, %s160
      %p162 = scmp.eq.s32.totalorder %s26, 0
      %p163 = por %p161, %p162
      %s164 = ssub.s32 %s20, %s27
      %p165 = scmp.eq.s32.totalorder %s164, 0
      %s167 = sadd.s32 %s166, 1
      %s168 = scalar_select %p165, %s166, %s167
      %p171 = pneg %p165
      %p172 = scmp.eq.s32.totalorder %s20, 1
      %p173 = por %p171, %p172
      %p174 = scmp.ne.s32.totalorder %s166, %s169
      %p175 = scmp.eq.s32.totalorder %s20, 0
      %p176 = por %p174, %p175
      %p177 = scmp.ne.s32.totalorder %s166, %s169
      %p178 = scmp.eq.s32.totalorder %s25, 1
      %p179 = por %p177, %p178
      %p180 = scmp.ne.s32.totalorder %s169, %s170
      %p181 = scmp.eq.s32.totalorder %s25, 0
      %p182 = por %p180, %p181
      %p183 = scmp.ne.s32.totalorder %s169, %s170
      %p184 = scmp.eq.s32.totalorder %s26, 1
      %p185 = por %p183, %p184
      %p187 = scmp.ne.s32.totalorder %s170, %s186
      %p188 = scmp.eq.s32.totalorder %s26, 0
      %p189 = por %p187, %p188
      %s190 = ssub.s32 %s20, %s27
      %p191 = scmp.eq.s32.totalorder %s190, 0
      %s193 = sadd.s32 %s192, 1
      %s194 = scalar_select %p191, %s192, %s193
      %p197 = pneg %p191
      %p198 = scmp.eq.s32.totalorder %s20, 1
      %p199 = por %p197, %p198
      %p200 = scmp.ne.s32.totalorder %s192, %s195
      %p201 = scmp.eq.s32.totalorder %s20, 0
      %p202 = por %p200, %p201
      %p203 = scmp.ne.s32.totalorder %s192, %s195
      %p204 = scmp.eq.s32.totalorder %s25, 1
      %p205 = por %p203, %p204
      %p206 = scmp.ne.s32.totalorder %s195, %s196
      %p207 = scmp.eq.s32.totalorder %s25, 0
      %p208 = por %p206, %p207
      %p209 = scmp.ne.s32.totalorder %s195, %s196
      %p210 = scmp.eq.s32.totalorder %s26, 1
      %p211 = por %p209, %p210
      %p213 = scmp.ne.s32.totalorder %s196, %s212
      %p214 = scmp.eq.s32.totalorder %s26, 0
      %p215 = por %p213, %p214
      %p216 = scmp.le.s32.totalorder 1, %s20
      %p217 = scmp.lt.s32.totalorder %s20, 3
      %p218 = pnand %p216, %p217
      %p219 = pneg %p218
      // Predicated region
      $region9: #{custom_efficientnet_forward.1} parent=5 // pred_check
        _
      $region10: #{custom_efficientnet_forward.1} parent=5 // pred_check_branch
        %221 = sbr.rel (%p218) target = $region12
      $region11: #{custom_efficientnet_forward.1} parent=5 // pred_region
        %s222 = ssub.s32 %s20, 1
        // Predicated region
        $region13: #{custom_efficientnet_forward.1} parent=11 // pred_check
          %p223 = pneg %p67
        $region14: #{custom_efficientnet_forward.1} parent=11 // pred_check_branch
          %225 = sbr.rel (%p223) target = $region16
        $region15: #{custom_efficientnet_forward.1} parent=11 // pred_region
          _
        $region16: #{custom_efficientnet_forward.1} parent=11 // pred_fallthru
          _
        // Predicated region
        $region17: #{custom_efficientnet_forward.1} parent=11 // pred_check
          %p226 = pneg %p88
        $region18: #{custom_efficientnet_forward.1} parent=11 // pred_check_branch
          %228 = sbr.rel (%p226) target = $region20
        $region19: #{custom_efficientnet_forward.1} parent=11 // pred_region
          _
        $region20: #{custom_efficientnet_forward.1} parent=11 // pred_fallthru
          _
        // Predicated region
        $region21: #{custom_efficientnet_forward.1} parent=11 // pred_check
          %p229 = pneg %p109
        $region22: #{custom_efficientnet_forward.1} parent=11 // pred_check_branch
          %231 = sbr.rel (%p229) target = $region24
        $region23: #{custom_efficientnet_forward.1} parent=11 // pred_region
          _
        $region24: #{custom_efficientnet_forward.1} parent=11 // pred_fallthru
          _
        // Predicated region
        $region25: #{custom_efficientnet_forward.1} parent=11 // pred_check
          %p232 = pneg %p130
        $region26: #{custom_efficientnet_forward.1} parent=11 // pred_check_branch
          %234 = sbr.rel (%p232) target = $region28
        $region27: #{custom_efficientnet_forward.1} parent=11 // pred_region
          _
        $region28: #{custom_efficientnet_forward.1} parent=11 // pred_fallthru
          _
      $region12: #{custom_efficientnet_forward.1} parent=5 // pred_fallthru
        _
      %p235 = scmp.lt.s32.totalorder %s20, 2
      // Predicated region
      $region29: #{custom_efficientnet_forward.1} parent=5 // pred_check
        %p236 = pneg %p235
      $region30: #{custom_efficientnet_forward.1} parent=5 // pred_check_branch
        %238 = sbr.rel (%p236) target = $region32
      $region31: #{custom_efficientnet_forward.1} parent=5 // pred_region
        // Predicated region
        $region33: #{custom_efficientnet_forward.1} parent=31 // pred_check
          %p239 = pneg %p40
        $region34: #{custom_efficientnet_forward.1} parent=31 // pred_check_branch
          %241 = sbr.rel (%p239) target = $region36
        $region35: #{custom_efficientnet_forward.1} parent=31 // pred_region
          %p242 = scmp.lt.s32.totalorder %s20, 1
          %s243 = scalar_select %p242, %s20, 1
          %s244 = smul.addr %s243, 32
          %s245 = smul.addr %s244, 8
          %s246 = scalar_lea.vmem %s0, %s245
        $region36: #{custom_efficientnet_forward.1} parent=31 // pred_fallthru
          _
      $region32: #{custom_efficientnet_forward.1} parent=5 // pred_fallthru
        _
      %p247 = scmp.le.s32.totalorder 1, %s20
      %p248 = scmp.lt.s32.totalorder %s20, 3
      %p249 = pnand %p247, %p248
      %p250 = pneg %p249
      // Predicated region
      $region37: #{custom_efficientnet_forward.1} parent=5 // pred_check
        _
      $region38: #{custom_efficientnet_forward.1} parent=5 // pred_check_branch
        %252 = sbr.rel (%p249) target = $region40
      $region39: #{custom_efficientnet_forward.1} parent=5 // pred_region
        %s253 = ssub.s32 %s20, 1
        %p254 = scmp.lt.s32.totalorder %s25, 1
        %s255 = scalar_select %p254, %s25, 1
        %s256 = smul.addr %s255, 32
        %s257 = smul.addr %s256, 8
        %s258 = scalar_lea.vmem %s0, %s257
        %p259 = pneg %p46
        %p260 = pneg %p43
        %p261 = pneg %p67
        %p262 = pneg %p64
        %p263 = pneg %p88
        %p264 = pneg %p85
        %p265 = pneg %p109
        %p266 = pneg %p106
        %p267 = pneg %p130
        %p268 = pneg %p127
        %p269 = pneg %p156
        %p270 = pneg %p153
        %p271 = scmp.lt.s32.totalorder %s25, 1
        %s272 = scalar_select %p271, %s25, 1
        %s273 = smul.addr %s272, 32
        %s274 = smul.addr %s273, 8
        %s275 = scalar_lea.vmem %s5, %s274
        %p276 = pneg %p182
        %p277 = pneg %p179
        %s278 = sand.u32 %s169, 1
        %s279 = scalar_lea.sflag [#allocation3], %s278
        %s280 = sand.u32 %s169, 1
        %s281 = scalar_lea.vmem [#allocation2], %s280
        %p282 = pneg %p208
        %p283 = pneg %p205
        %s284 = sand.u32 %s195, 1
        %s285 = scalar_lea.sflag [#allocation5], %s284
        %s286 = sand.u32 %s195, 1
        %s287 = scalar_lea.vmem [#allocation4], %s286
        %p288 = scmp.lt.s32.totalorder %s25, 1
        %s289 = scalar_select %p288, %s25, 1
        %s290 = smul.addr %s289, 32
        %s291 = smul.addr %s290, 8
        %s292 = scalar_lea.vmem %s0, %s291
        %p293 = scmp.lt.s32.totalorder %s25, 1
        %s294 = scalar_select %p293, %s25, 1
        %s295 = smul.addr %s294, 32
        %s296 = smul.addr %s295, 8
        %s297 = scalar_lea.vmem %s5, %s296
        %v298 = vld [vmem:[%s292] sm:$0xff]
        %v299 = vld [vmem:[%s292 + $0x8] sm:$0xff]
        %v300 = vld [vmem:[%s292 + $0x10] sm:$0xff]
        %v301 = vld [vmem:[%s292 + $0x18] sm:$0xff]
        %v302 = vld [vmem:[%s292 + $0x20] sm:$0xff]
        %v303 = vld [vmem:[%s292 + $0x28] sm:$0xff]
        %v304 = vld [vmem:[%s292 + $0x30] sm:$0xff]
        %v305 = vld [vmem:[%s292 + $0x38] sm:$0xff]
        %v306 = vld [vmem:[%s292 + $0x40] sm:$0xff]
        %v307 = vld [vmem:[%s292 + $0x48] sm:$0xff]
        %v308 = vld [vmem:[%s292 + $0x50] sm:$0xff]
        %v309 = vld [vmem:[%s292 + $0x58] sm:$0xff]
        %v310 = vld [vmem:[%s292 + $0x60] sm:$0xff]
        %v311 = vld [vmem:[%s292 + $0x68] sm:$0xff]
        %v312 = vld [vmem:[%s292 + $0x70] sm:$0xff]
        %v313 = vld [vmem:[%s292 + $0x78] sm:$0xff]
        %v314 = vld [vmem:[%s292 + $0x80] sm:$0xff]
        %v315 = vld [vmem:[%s292 + $0x88] sm:$0xff]
        %v316 = vld [vmem:[%s292 + $0x90] sm:$0xff]
        %v317 = vld [vmem:[%s292 + $0x98] sm:$0xff]
        %v318 = vld [vmem:[%s292 + $0xa0] sm:$0xff]
        %v319 = vld [vmem:[%s292 + $0xa8] sm:$0xff]
        %v320 = vld [vmem:[%s292 + $0xb0] sm:$0xff]
        %v321 = vld [vmem:[%s292 + $0xb8] sm:$0xff]
        %v322 = vld [vmem:[%s292 + $0xc0] sm:$0xff]
        %v323 = vld [vmem:[%s292 + $0xc8] sm:$0xff]
        %v324 = vld [vmem:[%s292 + $0xd0] sm:$0xff]
        %v325 = vld [vmem:[%s292 + $0xd8] sm:$0xff]
        %v326 = vld [vmem:[%s292 + $0xe0] sm:$0xff]
        %v327 = vld [vmem:[%s292 + $0xe8] sm:$0xff]
        %v328 = vld [vmem:[%s292 + $0xf0] sm:$0xff]
        %v329 = vld [vmem:[%s292 + $0xf8] sm:$0xff]
        %v330 = vld [vmem:[%s1] sm:$0xff]
        %v331 = vld [vmem:[%s1 + $0x8] sm:$0xff]
        %v332 = vld [vmem:[%s1 + $0x10] sm:$0xff]
        %v333 = vld [vmem:[%s1 + $0x18] sm:$0xff]
        %v334 = vld [vmem:[%s1 + $0x20] sm:$0xf]
        %v335 = vld [vmem:[%s2] sm:$0x1]
        %v337 = vlaneseq
        %v338 = vshrl.u32 %v337, 7
        %v339 = vsub.s32 0, %v338
        %v340 = vrot.slane %v335, %v339
        %vm342 = vcmask 293888
        %v344 = vsel %vm342, %v298, 0
        %v347 = vsel %vm342, %v299, 0
        %v350 = vsel %vm342, %v300, 0
        %v353 = vsel %vm342, %v301, 0
        %v356 = vsel %vm342, %v302, 0
        %v359 = vsel %vm342, %v303, 0
        %v362 = vsel %vm342, %v304, 0
        %v365 = vsel %vm342, %v305, 0
        %v368 = vsel %vm342, %v306, 0
        %v371 = vsel %vm342, %v307, 0
        %v374 = vsel %vm342, %v308, 0
        %v377 = vsel %vm342, %v309, 0
        %v380 = vsel %vm342, %v310, 0
        %v383 = vsel %vm342, %v311, 0
        %v386 = vsel %vm342, %v312, 0
        %v389 = vsel %vm342, %v313, 0
        %v392 = vsel %vm342, %v314, 0
        %v395 = vsel %vm342, %v315, 0
        %v398 = vsel %vm342, %v316, 0
        %v401 = vsel %vm342, %v317, 0
        %v404 = vsel %vm342, %v318, 0
        %v407 = vsel %vm342, %v319, 0
        %v410 = vsel %vm342, %v320, 0
        %v413 = vsel %vm342, %v321, 0
        %v416 = vsel %vm342, %v322, 0
        %v419 = vsel %vm342, %v323, 0
        %v422 = vsel %vm342, %v324, 0
        %v425 = vsel %vm342, %v325, 0
        %v428 = vsel %vm342, %v326, 0
        %v431 = vsel %vm342, %v327, 0
        %v434 = vsel %vm342, %v328, 0
        %v437 = vsel %vm342, %v329, 0
        %vm439 = vcmask 1043456
        %v441 = vsel %vm439, %v334, 0
        %443 = vmatprep.subr.mxu0 0.0
        %444 = vmatpush1.msra.mxu0 0.0
        %445 = vmatprep.subr.mxu0 0.0
        %446 = vmatpush1.msra.mxu0 0.0
        %447 = vmatprep.subr.mxu0 0.0
        %448 = vmatpush1.msra.mxu0 0.0
        %449 = vmatprep.subr.mxu0 0.0
        %450 = vmatpush1.msra.mxu0 0.0
        %451 = vmatprep.subr.mxu0 0.0
        %452 = vmatpush1.msra.mxu0 0.0
        %453 = vmatprep.subr.mxu0 0.0
        %454 = vmatpush1.msra.mxu0 0.0
        %455 = vmatprep.subr.mxu0 0.0
        %456 = vmatpush1.msra.mxu0 0.0
        %457 = vmatprep.subr.mxu0 0.0
        %458 = vmatpush1.msra.mxu0 0.0
        %459 = vmatprep.subr.mxu0 0.0
        %460 = vmatpush1.msra.mxu0 0.0
        %461 = vmatprep.subr.mxu0 0.0
        %462 = vmatpush1.msra.mxu0 0.0
        %463 = vmatprep.subr.mxu0 0.0
        %464 = vmatpush1.msra.mxu0 0.0
        %465 = vmatprep.subr.mxu0 0.0
        %466 = vmatpush1.msra.mxu0 %v441
        %467 = vmatprep.subr.mxu0 0.0
        %468 = vmatpush1.msra.mxu0 %v333
        %469 = vmatprep.subr.mxu0 0.0
        %470 = vmatpush1.msra.mxu0 %v332
        %471 = vmatprep.subr.mxu0 0.0
        %472 = vmatpush1.msra.mxu0 %v331
        %473 = vmatprep.subr.mxu0 0.0
        %474 = vmatpush1.msra.mxu0 %v330
        %475 = vmatprep.subr.mxu0 0.0
        %476 = vmatpush2.msra.mxu0 0.0
        %477 = vmatprep.subr.mxu0 0.0
        %478 = vmatpush2.msra.mxu0 0.0
        %479 = vmatprep.subr.mxu0 0.0
        %480 = vmatpush2.msra.mxu0 0.0
        %481 = vmatprep.subr.mxu0 0.0
        %482 = vmatpush2.msra.mxu0 0.0
        %483 = vmatprep.subr.mxu0 0.0
        %484 = vmatpush2.msra.mxu0 0.0
        %485 = vmatprep.subr.mxu0 0.0
        %486 = vmatpush2.msra.mxu0 0.0
        %487 = vmatprep.subr.mxu0 0.0
        %488 = vmatpush2.msra.mxu0 0.0
        %489 = vmatprep.subr.mxu0 0.0
        %490 = vmatpush2.msra.mxu0 0.0
        %491 = vmatprep.subr.mxu0 0.0
        %492 = vmatpush2.msra.mxu0 0.0
        %493 = vmatprep.subr.mxu0 0.0
        %494 = vmatpush2.msra.mxu0 0.0
        %495 = vmatprep.subr.mxu0 0.0
        %496 = vmatpush2.msra.mxu0 0.0
        %497 = vmatprep.subr.mxu0 0.0
        %498 = vmatpush2.msra.mxu0 0.0
        %499 = vmatprep.subr.mxu0 0.0
        %500 = vmatpush2.msra.mxu0 0.0
        %501 = vmatprep.subr.mxu0 0.0
        %502 = vmatpush2.msra.mxu0 0.0
        %503 = vmatprep.subr.mxu0 0.0
        %504 = vmatpush2.msra.mxu0 0.0
        %505 = vmatprep.subr.mxu0 0.0
        %506 = vmatpush2.msra.mxu0 0.0
        %507 = vmatprep.mubr.f32.mxu0 0.0
        %508 = vmatmul.mubr.f32.gmra.mxu0 %v344
        %v509 = vpop.f32.mrf.mxu0
        %v510 = vadd.f32 %v340, %v509
        %v511 = vpop.f32.mrf.mxu0
        %512 = vmatprep.mubr.f32.mxu0 0.0
        %513 = vmatmul.mubr.f32.gmra.mxu0 %v347
        %v514 = vpop.f32.mrf.mxu0
        %v515 = vadd.f32 %v340, %v514
        %v516 = vpop.f32.mrf.mxu0
        %517 = vmatprep.mubr.f32.mxu0 0.0
        %518 = vmatmul.mubr.f32.gmra.mxu0 %v350
        %v519 = vpop.f32.mrf.mxu0
        %v520 = vadd.f32 %v340, %v519
        %v521 = vpop.f32.mrf.mxu0
        %522 = vmatprep.mubr.f32.mxu0 0.0
        %523 = vmatmul.mubr.f32.gmra.mxu0 %v353
        %v524 = vpop.f32.mrf.mxu0
        %v525 = vadd.f32 %v340, %v524
        %v526 = vpop.f32.mrf.mxu0
        %527 = vmatprep.mubr.f32.mxu0 0.0
        %528 = vmatmul.mubr.f32.gmra.mxu0 %v356
        %v529 = vpop.f32.mrf.mxu0
        %v530 = vadd.f32 %v340, %v529
        %v531 = vpop.f32.mrf.mxu0
        %532 = vmatprep.mubr.f32.mxu0 0.0
        %533 = vmatmul.mubr.f32.gmra.mxu0 %v359
        %v534 = vpop.f32.mrf.mxu0
        %v535 = vadd.f32 %v340, %v534
        %v536 = vpop.f32.mrf.mxu0
        %537 = vmatprep.mubr.f32.mxu0 0.0
        %538 = vmatmul.mubr.f32.gmra.mxu0 %v362
        %v539 = vpop.f32.mrf.mxu0
        %v540 = vadd.f32 %v340, %v539
        %v541 = vpop.f32.mrf.mxu0
        %542 = vmatprep.mubr.f32.mxu0 0.0
        %543 = vmatmul.mubr.f32.gmra.mxu0 %v365
        %v544 = vpop.f32.mrf.mxu0
        %v545 = vadd.f32 %v340, %v544
        %v546 = vpop.f32.mrf.mxu0
        %547 = vmatprep.mubr.f32.mxu0 0.0
        %548 = vmatmul.mubr.f32.gmra.mxu0 %v368
        %v549 = vpop.f32.mrf.mxu0
        %v550 = vadd.f32 %v340, %v549
        %v551 = vpop.f32.mrf.mxu0
        %552 = vmatprep.mubr.f32.mxu0 0.0
        %553 = vmatmul.mubr.f32.gmra.mxu0 %v371
        %v554 = vpop.f32.mrf.mxu0
        %v555 = vadd.f32 %v340, %v554
        %v556 = vpop.f32.mrf.mxu0
        %557 = vmatprep.mubr.f32.mxu0 0.0
        %558 = vmatmul.mubr.f32.gmra.mxu0 %v374
        %v559 = vpop.f32.mrf.mxu0
        %v560 = vadd.f32 %v340, %v559
        %v561 = vpop.f32.mrf.mxu0
        %562 = vmatprep.mubr.f32.mxu0 0.0
        %563 = vmatmul.mubr.f32.gmra.mxu0 %v377
        %v564 = vpop.f32.mrf.mxu0
        %v565 = vadd.f32 %v340, %v564
        %v566 = vpop.f32.mrf.mxu0
        %567 = vmatprep.mubr.f32.mxu0 0.0
        %568 = vmatmul.mubr.f32.gmra.mxu0 %v380
        %v569 = vpop.f32.mrf.mxu0
        %v570 = vadd.f32 %v340, %v569
        %v571 = vpop.f32.mrf.mxu0
        %572 = vmatprep.mubr.f32.mxu0 0.0
        %573 = vmatmul.mubr.f32.gmra.mxu0 %v383
        %v574 = vpop.f32.mrf.mxu0
        %v575 = vadd.f32 %v340, %v574
        %v576 = vpop.f32.mrf.mxu0
        %577 = vmatprep.mubr.f32.mxu0 0.0
        %578 = vmatmul.mubr.f32.gmra.mxu0 %v386
        %v579 = vpop.f32.mrf.mxu0
        %v580 = vadd.f32 %v340, %v579
        %v581 = vpop.f32.mrf.mxu0
        %582 = vmatprep.mubr.f32.mxu0 0.0
        %583 = vmatmul.mubr.f32.gmra.mxu0 %v389
        %v584 = vpop.f32.mrf.mxu0
        %v585 = vadd.f32 %v340, %v584
        %v586 = vpop.f32.mrf.mxu0
        %587 = vmatprep.mubr.f32.mxu0 0.0
        %588 = vmatmul.mubr.f32.gmra.mxu0 %v392
        %v589 = vpop.f32.mrf.mxu0
        %v590 = vadd.f32 %v340, %v589
        %v591 = vpop.f32.mrf.mxu0
        %592 = vmatprep.mubr.f32.mxu0 0.0
        %593 = vmatmul.mubr.f32.gmra.mxu0 %v395
        %v594 = vpop.f32.mrf.mxu0
        %v595 = vadd.f32 %v340, %v594
        %v596 = vpop.f32.mrf.mxu0
        %597 = vmatprep.mubr.f32.mxu0 0.0
        %598 = vmatmul.mubr.f32.gmra.mxu0 %v398
        %v599 = vpop.f32.mrf.mxu0
        %v600 = vadd.f32 %v340, %v599
        %v601 = vpop.f32.mrf.mxu0
        %602 = vmatprep.mubr.f32.mxu0 0.0
        %603 = vmatmul.mubr.f32.gmra.mxu0 %v401
        %v604 = vpop.f32.mrf.mxu0
        %v605 = vadd.f32 %v340, %v604
        %v606 = vpop.f32.mrf.mxu0
        %607 = vmatprep.mubr.f32.mxu0 0.0
        %608 = vmatmul.mubr.f32.gmra.mxu0 %v404
        %v609 = vpop.f32.mrf.mxu0
        %v610 = vadd.f32 %v340, %v609
        %v611 = vpop.f32.mrf.mxu0
        %612 = vmatprep.mubr.f32.mxu0 0.0
        %613 = vmatmul.mubr.f32.gmra.mxu0 %v407
        %v614 = vpop.f32.mrf.mxu0
        %v615 = vadd.f32 %v340, %v614
        %v616 = vpop.f32.mrf.mxu0
        %617 = vmatprep.mubr.f32.mxu0 0.0
        %618 = vmatmul.mubr.f32.gmra.mxu0 %v410
        %v619 = vpop.f32.mrf.mxu0
        %v620 = vadd.f32 %v340, %v619
        %v621 = vpop.f32.mrf.mxu0
        %622 = vmatprep.mubr.f32.mxu0 0.0
        %623 = vmatmul.mubr.f32.gmra.mxu0 %v413
        %v624 = vpop.f32.mrf.mxu0
        %v625 = vadd.f32 %v340, %v624
        %v626 = vpop.f32.mrf.mxu0
        %627 = vmatprep.mubr.f32.mxu0 0.0
        %628 = vmatmul.mubr.f32.gmra.mxu0 %v416
        %v629 = vpop.f32.mrf.mxu0
        %v630 = vadd.f32 %v340, %v629
        %v631 = vpop.f32.mrf.mxu0
        %632 = vmatprep.mubr.f32.mxu0 0.0
        %633 = vmatmul.mubr.f32.gmra.mxu0 %v419
        %v634 = vpop.f32.mrf.mxu0
        %v635 = vadd.f32 %v340, %v634
        %v636 = vpop.f32.mrf.mxu0
        %637 = vmatprep.mubr.f32.mxu0 0.0
        %638 = vmatmul.mubr.f32.gmra.mxu0 %v422
        %v639 = vpop.f32.mrf.mxu0
        %v640 = vadd.f32 %v340, %v639
        %v641 = vpop.f32.mrf.mxu0
        %642 = vmatprep.mubr.f32.mxu0 0.0
        %643 = vmatmul.mubr.f32.gmra.mxu0 %v425
        %v644 = vpop.f32.mrf.mxu0
        %v645 = vadd.f32 %v340, %v644
        %v646 = vpop.f32.mrf.mxu0
        %647 = vmatprep.mubr.f32.mxu0 0.0
        %648 = vmatmul.mubr.f32.gmra.mxu0 %v428
        %v649 = vpop.f32.mrf.mxu0
        %v650 = vadd.f32 %v340, %v649
        %v651 = vpop.f32.mrf.mxu0
        %652 = vmatprep.mubr.f32.mxu0 0.0
        %653 = vmatmul.mubr.f32.gmra.mxu0 %v431
        %v654 = vpop.f32.mrf.mxu0
        %v655 = vadd.f32 %v340, %v654
        %v656 = vpop.f32.mrf.mxu0
        %657 = vmatprep.mubr.f32.mxu0 0.0
        %658 = vmatmul.mubr.f32.gmra.mxu0 %v434
        %v659 = vpop.f32.mrf.mxu0
        %v660 = vadd.f32 %v340, %v659
        %v661 = vpop.f32.mrf.mxu0
        %662 = vmatprep.mubr.f32.mxu0 0.0
        %663 = vmatmul.mubr.f32.gmra.mxu0 %v437
        %v664 = vpop.f32.mrf.mxu0
        %v665 = vadd.f32 %v340, %v664
        %v666 = vpop.f32.mrf.mxu0
        %667 = vdwg.mxu0
        %v668 = vmax.f32 %v510, 0.0
        %v669 = vmax.f32 %v515, 0.0
        %v670 = vmax.f32 %v520, 0.0
        %v671 = vmax.f32 %v525, 0.0
        %v672 = vmax.f32 %v530, 0.0
        %v673 = vmax.f32 %v535, 0.0
        %v674 = vmax.f32 %v540, 0.0
        %v675 = vmax.f32 %v545, 0.0
        %v676 = vmax.f32 %v550, 0.0
        %v677 = vmax.f32 %v555, 0.0
        %v678 = vmax.f32 %v560, 0.0
        %v679 = vmax.f32 %v565, 0.0
        %v680 = vmax.f32 %v570, 0.0
        %v681 = vmax.f32 %v575, 0.0
        %v682 = vmax.f32 %v580, 0.0
        %v683 = vmax.f32 %v585, 0.0
        %v684 = vmax.f32 %v590, 0.0
        %v685 = vmax.f32 %v595, 0.0
        %v686 = vmax.f32 %v600, 0.0
        %v687 = vmax.f32 %v605, 0.0
        %v688 = vmax.f32 %v610, 0.0
        %v689 = vmax.f32 %v615, 0.0
        %v690 = vmax.f32 %v620, 0.0
        %v691 = vmax.f32 %v625, 0.0
        %v692 = vmax.f32 %v630, 0.0
        %v693 = vmax.f32 %v635, 0.0
        %v694 = vmax.f32 %v640, 0.0
        %v695 = vmax.f32 %v645, 0.0
        %v696 = vmax.f32 %v650, 0.0
        %v697 = vmax.f32 %v655, 0.0
        %v698 = vmax.f32 %v660, 0.0
        %v699 = vmax.f32 %v665, 0.0
        %700 = vxpose.xlu0.b32.start [1/16] %v668, 128
        %701 = vxpose.xlu0.b32.cont [2/16] %v669, 128
        %702 = vxpose.xlu0.b32.cont [3/16] %v670, 128
        %703 = vxpose.xlu0.b32.cont [4/16] %v671, 128
        %704 = vxpose.xlu0.b32.cont [5/16] %v672, 128
        %705 = vxpose.xlu0.b32.cont [6/16] %v673, 128
        %706 = vxpose.xlu0.b32.cont [7/16] %v674, 128
        %707 = vxpose.xlu0.b32.cont [8/16] %v675, 128
        %708 = vxpose.xlu0.b32.cont [9/16] %v676, 128
        %709 = vxpose.xlu0.b32.cont [10/16] %v677, 128
        %710 = vxpose.xlu0.b32.cont [11/16] %v678, 128
        %711 = vxpose.xlu0.b32.cont [12/16] %v679, 128
        %712 = vxpose.xlu0.b32.cont [13/16] %v680, 128
        %713 = vxpose.xlu0.b32.cont [14/16] %v681, 128
        %714 = vxpose.xlu0.b32.cont [15/16] %v682, 128
        %715 = vxpose.xlu0.b32.end [16/16] %v683, 128
        %v716 = vpop.trf.xlu0
        %v717 = vpop.trf.xlu0
        %v718 = vpop.trf.xlu0
        %v719 = vpop.trf.xlu0
        %v720 = vpop.trf.xlu0
        %v721 = vpop.trf.xlu0
        %v722 = vpop.trf.xlu0
        %v723 = vpop.trf.xlu0
        %v724 = vpop.trf.xlu0
        %v725 = vpop.trf.xlu0
        %v726 = vpop.trf.xlu0
        %v727 = vpop.trf.xlu0
        %v728 = vpop.trf.xlu0
        %v729 = vpop.trf.xlu0
        %v730 = vpop.trf.xlu0
        %v731 = vpop.trf.xlu0
        %732 = vxpose.xlu0.b32.start [1/16] %v684, 128
        %733 = vxpose.xlu0.b32.cont [2/16] %v685, 128
        %734 = vxpose.xlu0.b32.cont [3/16] %v686, 128
        %735 = vxpose.xlu0.b32.cont [4/16] %v687, 128
        %736 = vxpose.xlu0.b32.cont [5/16] %v688, 128
        %737 = vxpose.xlu0.b32.cont [6/16] %v689, 128
        %738 = vxpose.xlu0.b32.cont [7/16] %v690, 128
        %739 = vxpose.xlu0.b32.cont [8/16] %v691, 128
        %740 = vxpose.xlu0.b32.cont [9/16] %v692, 128
        %741 = vxpose.xlu0.b32.cont [10/16] %v693, 128
        %742 = vxpose.xlu0.b32.cont [11/16] %v694, 128
        %743 = vxpose.xlu0.b32.cont [12/16] %v695, 128
        %744 = vxpose.xlu0.b32.cont [13/16] %v696, 128
        %745 = vxpose.xlu0.b32.cont [14/16] %v697, 128
        %746 = vxpose.xlu0.b32.cont [15/16] %v698, 128
        %747 = vxpose.xlu0.b32.end [16/16] %v699, 128
        %v748 = vpop.trf.xlu0
        %v749 = vpop.trf.xlu0
        %v750 = vpop.trf.xlu0
        %v751 = vpop.trf.xlu0
        %v752 = vpop.trf.xlu0
        %v753 = vpop.trf.xlu0
        %v754 = vpop.trf.xlu0
        %v755 = vpop.trf.xlu0
        %v756 = vpop.trf.xlu0
        %v757 = vpop.trf.xlu0
        %v758 = vpop.trf.xlu0
        %v759 = vpop.trf.xlu0
        %v760 = vpop.trf.xlu0
        %v761 = vpop.trf.xlu0
        %v762 = vpop.trf.xlu0
        %v763 = vpop.trf.xlu0
        %764 = vst [vmem:[%s297] sm:$0xff] %v716
        %765 = vst [vmem:[%s297 + $0x8] sm:$0xff] %v748
        %766 = vst [vmem:[%s297 + $0x10] sm:$0xff] %v717
        %767 = vst [vmem:[%s297 + $0x18] sm:$0xff] %v749
        %768 = vst [vmem:[%s297 + $0x20] sm:$0xff] %v718
        %769 = vst [vmem:[%s297 + $0x28] sm:$0xff] %v750
        %770 = vst [vmem:[%s297 + $0x30] sm:$0xff] %v719
        %771 = vst [vmem:[%s297 + $0x38] sm:$0xff] %v751
        %772 = vst [vmem:[%s297 + $0x40] sm:$0xff] %v720
        %773 = vst [vmem:[%s297 + $0x48] sm:$0xff] %v752
        %774 = vst [vmem:[%s297 + $0x50] sm:$0xff] %v721
        %775 = vst [vmem:[%s297 + $0x58] sm:$0xff] %v753
        %776 = vst [vmem:[%s297 + $0x60] sm:$0xff] %v722
        %777 = vst [vmem:[%s297 + $0x68] sm:$0xff] %v754
        %778 = vst [vmem:[%s297 + $0x70] sm:$0xff] %v723
        %779 = vst [vmem:[%s297 + $0x78] sm:$0xff] %v755
        %780 = vst [vmem:[%s297 + $0x80] sm:$0xff] %v724
        %781 = vst [vmem:[%s297 + $0x88] sm:$0xff] %v756
        %782 = vst [vmem:[%s297 + $0x90] sm:$0xff] %v725
        %783 = vst [vmem:[%s297 + $0x98] sm:$0xff] %v757
        %784 = vst [vmem:[%s297 + $0xa0] sm:$0xff] %v726
        %785 = vst [vmem:[%s297 + $0xa8] sm:$0xff] %v758
        %786 = vst [vmem:[%s297 + $0xb0] sm:$0xff] %v727
        %787 = vst [vmem:[%s297 + $0xb8] sm:$0xff] %v759
        %788 = vst [vmem:[%s297 + $0xc0] sm:$0xff] %v728
        %789 = vst [vmem:[%s297 + $0xc8] sm:$0xff] %v760
        %790 = vst [vmem:[%s297 + $0xd0] sm:$0xff] %v729
        %791 = vst [vmem:[%s297 + $0xd8] sm:$0xff] %v761
        %792 = vst [vmem:[%s297 + $0xe0] sm:$0xff] %v730
        %793 = vst [vmem:[%s297 + $0xe8] sm:$0xff] %v762
        %794 = vst [vmem:[%s297 + $0xf0] sm:$0xff] %v731
        %795 = vst [vmem:[%s297 + $0xf8] sm:$0xff] %v763
        %v796 = vadd.f32 %v668, %v669
        %v797 = vadd.f32 %v796, %v670
        %v798 = vadd.f32 %v797, %v671
        %v799 = vadd.f32 %v798, %v672
        %v800 = vadd.f32 %v799, %v673
        %v801 = vadd.f32 %v800, %v674
        %v802 = vadd.f32 %v801, %v675
        %v803 = vadd.f32 %v802, %v676
        %v804 = vadd.f32 %v803, %v677
        %v805 = vadd.f32 %v804, %v678
        %v806 = vadd.f32 %v805, %v679
        %v807 = vadd.f32 %v806, %v680
        %v808 = vadd.f32 %v807, %v681
        %v809 = vadd.f32 %v808, %v682
        %v810 = vadd.f32 %v809, %v683
        %v811 = vadd.f32 %v810, %v684
        %v812 = vadd.f32 %v811, %v685
        %v813 = vadd.f32 %v812, %v686
        %v814 = vadd.f32 %v813, %v687
        %v815 = vadd.f32 %v814, %v688
        %v816 = vadd.f32 %v815, %v689
        %v817 = vadd.f32 %v816, %v690
        %v818 = vadd.f32 %v817, %v691
        %v819 = vadd.f32 %v818, %v692
        %v820 = vadd.f32 %v819, %v693
        %v821 = vadd.f32 %v820, %v694
        %v822 = vadd.f32 %v821, %v695
        %v823 = vadd.f32 %v822, %v696
        %v824 = vadd.f32 %v823, %v697
        %v825 = vadd.f32 %v824, %v698
        %v826 = vadd.f32 %v825, %v699
        %v827 = vrot.slane %v826, 4
        %v828 = vadd.f32 %v826, %v827
        %v829 = vrot.slane %v828, 2
        %v830 = vadd.f32 %v828, %v829
        %v831 = vrot.slane %v830, 1
        %v832 = vadd.f32 %v830, %v831
        %v833 = vrcp.pop 256.0
        %v834 = vmul.f32 %v832, %v833
        %835 = vst [vmem:[%s281] sm:$0x1] %v834
        %v836 = vld [vmem:[%s3] sm:$0xff]
        %v837 = vld [vmem:[%s3 + $0x8] sm:$0xff]
        %v838 = vld [vmem:[%s3 + $0x10] sm:$0xff]
        %v839 = vld [vmem:[%s3 + $0x18] sm:$0xff]
        %v840 = vld [vmem:[%s3 + $0x20] sm:$0xff]
        %v841 = vld [vmem:[%s3 + $0x28] sm:$0xff]
        %v842 = vld [vmem:[%s3 + $0x30] sm:$0xff]
        %v843 = vld [vmem:[%s3 + $0x38] sm:$0xff]
        %v844 = vld [vmem:[%s3 + $0x40] sm:$0xff]
        %v845 = vld [vmem:[%s3 + $0x48] sm:$0xff]
        %v846 = vld [vmem:[%s3 + $0x50] sm:$0xff]
        %v847 = vld [vmem:[%s3 + $0x58] sm:$0xff]
        %v848 = vld [vmem:[%s3 + $0x60] sm:$0xff]
        %v849 = vld [vmem:[%s3 + $0x68] sm:$0xff]
        %v850 = vld [vmem:[%s3 + $0x70] sm:$0xff]
        %v851 = vld [vmem:[%s3 + $0x78] sm:$0xff]
        %v852 = vld [vmem:[%s4] sm:$0x1]
        %853 = vmatprep.subr.mxu0 0.0
        %854 = vmatpush1.msra.mxu0 %v851
        %855 = vmatprep.subr.mxu0 0.0
        %856 = vmatpush1.msra.mxu0 %v850
        %857 = vmatprep.subr.mxu0 0.0
        %858 = vmatpush1.msra.mxu0 %v849
        %859 = vmatprep.subr.mxu0 0.0
        %860 = vmatpush1.msra.mxu0 %v848
        %861 = vmatprep.subr.mxu0 0.0
        %862 = vmatpush1.msra.mxu0 %v847
        %863 = vmatprep.subr.mxu0 0.0
        %864 = vmatpush1.msra.mxu0 %v846
        %865 = vmatprep.subr.mxu0 0.0
        %866 = vmatpush1.msra.mxu0 %v845
        %867 = vmatprep.subr.mxu0 0.0
        %868 = vmatpush1.msra.mxu0 %v844
        %869 = vmatprep.subr.mxu0 0.0
        %870 = vmatpush1.msra.mxu0 %v843
        %871 = vmatprep.subr.mxu0 0.0
        %872 = vmatpush1.msra.mxu0 %v842
        %873 = vmatprep.subr.mxu0 0.0
        %874 = vmatpush1.msra.mxu0 %v841
        %875 = vmatprep.subr.mxu0 0.0
        %876 = vmatpush1.msra.mxu0 %v840
        %877 = vmatprep.subr.mxu0 0.0
        %878 = vmatpush1.msra.mxu0 %v839
        %879 = vmatprep.subr.mxu0 0.0
        %880 = vmatpush1.msra.mxu0 %v838
        %881 = vmatprep.subr.mxu0 0.0
        %882 = vmatpush1.msra.mxu0 %v837
        %883 = vmatprep.subr.mxu0 0.0
        %884 = vmatpush1.msra.mxu0 %v836
        %885 = vmatprep.subr.mxu0 0.0
        %886 = vmatpush2.msra.mxu0 0.0
        %887 = vmatprep.subr.mxu0 0.0
        %888 = vmatpush2.msra.mxu0 0.0
        %889 = vmatprep.subr.mxu0 0.0
        %890 = vmatpush2.msra.mxu0 0.0
        %891 = vmatprep.subr.mxu0 0.0
        %892 = vmatpush2.msra.mxu0 0.0
        %893 = vmatprep.subr.mxu0 0.0
        %894 = vmatpush2.msra.mxu0 0.0
        %895 = vmatprep.subr.mxu0 0.0
        %896 = vmatpush2.msra.mxu0 0.0
        %897 = vmatprep.subr.mxu0 0.0
        %898 = vmatpush2.msra.mxu0 0.0
        %899 = vmatprep.subr.mxu0 0.0
        %900 = vmatpush2.msra.mxu0 0.0
        %901 = vmatprep.subr.mxu0 0.0
        %902 = vmatpush2.msra.mxu0 0.0
        %903 = vmatprep.subr.mxu0 0.0
        %904 = vmatpush2.msra.mxu0 0.0
        %905 = vmatprep.subr.mxu0 0.0
        %906 = vmatpush2.msra.mxu0 0.0
        %907 = vmatprep.subr.mxu0 0.0
        %908 = vmatpush2.msra.mxu0 0.0
        %909 = vmatprep.subr.mxu0 0.0
        %910 = vmatpush2.msra.mxu0 0.0
        %911 = vmatprep.subr.mxu0 0.0
        %912 = vmatpush2.msra.mxu0 0.0
        %913 = vmatprep.subr.mxu0 0.0
        %914 = vmatpush2.msra.mxu0 0.0
        %915 = vmatprep.subr.mxu0 0.0
        %916 = vmatpush2.msra.mxu0 0.0
        %917 = vmatprep.mubr.f32.mxu0 0.0
        %918 = vmatmul.mubr.f32.gmra.mxu0 %v834
        %v919 = vpop.f32.mrf.mxu0
        %v920 = vadd.f32 %v852, %v919
        %v921 = vpop.f32.mrf.mxu0
        %922 = vdwg.mxu0
        %923 = vst [vmem:[%s287] sm:$0x1] %v920
        %p924 = scmp.lt.s32.totalorder %s25, 1
        %s925 = scalar_select %p924, %s25, 1
        %s926 = smul.addr %s925, 32
        %s927 = smul.addr %s926, 8
        %s928 = scalar_lea.vmem %s5, %s927
        %s929 = sand.u32 %s169, 1
        %s930 = scalar_lea.sflag [#allocation3], %s929
        %s931 = sand.u32 %s169, 1
        %s932 = scalar_lea.vmem [#allocation2], %s931
        %s933 = sand.u32 %s195, 1
        %s934 = scalar_lea.sflag [#allocation5], %s933
        %s935 = sand.u32 %s195, 1
        %s936 = scalar_lea.vmem [#allocation4], %s935
        // Predicated region
        $region41: #{custom_efficientnet_forward.1} parent=39 // pred_check
          %p937 = pneg %p153
        $region42: #{custom_efficientnet_forward.1} parent=39 // pred_check_branch
          %939 = sbr.rel (%p937) target = $region44
        $region43: #{custom_efficientnet_forward.1} parent=39 // pred_region
          _
        $region44: #{custom_efficientnet_forward.1} parent=39 // pred_fallthru
          _
        // Predicated region
        $region45: #{custom_efficientnet_forward.1} parent=39 // pred_check
          %p940 = pneg %p179
        $region46: #{custom_efficientnet_forward.1} parent=39 // pred_check_branch
          %942 = sbr.rel (%p940) target = $region48
        $region47: #{custom_efficientnet_forward.1} parent=39 // pred_region
          %s944 = ssub.s32 16, 16
          %945 = vsyncadd %s930, %s944
          %s946 = smul.addr %s25, 16
          %s947 = scalar_lea.hbm %s6, %s946
          %s949 = sshll.u32 %s932, 4
          %s950 = int_to_ptr.vmem [resolvable:$true] %s949
          %952 = dma.vmem_to_hbm [thread:$0]  %s950, 16, %s947, %s930
        $region48: #{custom_efficientnet_forward.1} parent=39 // pred_fallthru
          _
        // Predicated region
        $region49: #{custom_efficientnet_forward.1} parent=39 // pred_check
          %p953 = pneg %p205
        $region50: #{custom_efficientnet_forward.1} parent=39 // pred_check_branch
          %955 = sbr.rel (%p953) target = $region52
        $region51: #{custom_efficientnet_forward.1} parent=39 // pred_region
          %s957 = ssub.s32 16, 16
          %958 = vsyncadd %s934, %s957
          %s959 = smul.addr %s25, 16
          %s960 = scalar_lea.hbm %s7, %s959
          %s962 = sshll.u32 %s936, 4
          %s963 = int_to_ptr.vmem [resolvable:$true] %s962
          %965 = dma.vmem_to_hbm [thread:$0]  %s963, 16, %s960, %s934
        $region52: #{custom_efficientnet_forward.1} parent=39 // pred_fallthru
          _
      $region40: #{custom_efficientnet_forward.1} parent=5 // pred_fallthru
        _
      %p966 = scmp.le.s32.totalorder 2, %s20
      // Predicated region
      $region53: #{custom_efficientnet_forward.1} parent=5 // pred_check
        %p967 = pneg %p966
      $region54: #{custom_efficientnet_forward.1} parent=5 // pred_check_branch
        %969 = sbr.rel (%p967) target = $region56
      $region55: #{custom_efficientnet_forward.1} parent=5 // pred_region
        %s970 = ssub.s32 %s20, 2
        // Predicated region
        $region57: #{custom_efficientnet_forward.1} parent=55 // pred_check
          %p971 = pneg %p159
        $region58: #{custom_efficientnet_forward.1} parent=55 // pred_check_branch
          %973 = sbr.rel (%p971) target = $region60
        $region59: #{custom_efficientnet_forward.1} parent=55 // pred_region
          %p974 = scmp.lt.s32.totalorder %s26, 1
          %s975 = scalar_select %p974, %s26, 1
          %s976 = smul.addr %s975, 32
          %s977 = smul.addr %s976, 8
          %s978 = scalar_lea.vmem %s5, %s977
        $region60: #{custom_efficientnet_forward.1} parent=55 // pred_fallthru
          _
        // Predicated region
        $region61: #{custom_efficientnet_forward.1} parent=55 // pred_check
          %p979 = pneg %p185
        $region62: #{custom_efficientnet_forward.1} parent=55 // pred_check_branch
          %981 = sbr.rel (%p979) target = $region64
        $region63: #{custom_efficientnet_forward.1} parent=55 // pred_region
          %s982 = sand.u32 %s170, 1
          %s983 = scalar_lea.sflag [#allocation3], %s982
          %s984 = sand.u32 %s170, 1
          %s985 = scalar_lea.vmem [#allocation2], %s984
          %986 = dma.done %s983, 16
        $region64: #{custom_efficientnet_forward.1} parent=55 // pred_fallthru
          _
        // Predicated region
        $region65: #{custom_efficientnet_forward.1} parent=55 // pred_check
          %p987 = pneg %p211
        $region66: #{custom_efficientnet_forward.1} parent=55 // pred_check_branch
          %989 = sbr.rel (%p987) target = $region68
        $region67: #{custom_efficientnet_forward.1} parent=55 // pred_region
          %s990 = sand.u32 %s196, 1
          %s991 = scalar_lea.sflag [#allocation5], %s990
          %s992 = sand.u32 %s196, 1
          %s993 = scalar_lea.vmem [#allocation4], %s992
          %994 = dma.done %s991, 16
        $region68: #{custom_efficientnet_forward.1} parent=55 // pred_fallthru
          _
      $region56: #{custom_efficientnet_forward.1} parent=5 // pred_fallthru
        _
    $region6: #{custom_efficientnet_forward.1} parent=1 // loop_footer
      %s24 = sadd.s32 1, %s20
    $region7: #{custom_efficientnet_forward.1} parent=1 // loop_footer_branch
      %19 = sbr.rel target = $region3
    $region8: #{custom_efficientnet_forward.1} parent=1 // loop_exit
      _
    %995 = vsyncpa [#allocation3], 1
    %s996 = scalar_lea.sflag [#allocation3], 1
    %997 = vsyncpa %s996, 1
    %998 = vsyncpa [#allocation5], 1
    %s999 = scalar_lea.sflag [#allocation5], 1
    %1000 = vsyncpa %s999, 1

</llo_original>
